<compile_context>
chip_gen: v5e
topology: v5e:2x2
jax: 0.10.0
libtpu: 0.0.40
codegen_flags: <defaults>
</compile_context>

<pallas_src>
import math

import jax
import jax.numpy as jnp
from jax.experimental import pallas as pl
from jax.experimental.pallas import tpu as pltpu


def _round_up(x, m):
    return ((x + m - 1) // m) * m


def _mlp_kernel(x_ref, w1_ref, b1_ref, w2_ref, b2_ref, w3_ref, b3_ref, o_ref):
    # layer1 + ReLU  (bf16 MXU inputs, f32 accumulate, f32 epilogue)
    x = x_ref[...].astype(jnp.bfloat16)
    h1 = jnp.dot(x, w1_ref[...], preferred_element_type=jnp.float32)
    h1 = jnp.maximum(h1 + b1_ref[...], 0.0)
    # dropout(0.3): identity in eval mode.
    # layer2 + ReLU
    h2 = jnp.dot(h1.astype(jnp.bfloat16), w2_ref[...], preferred_element_type=jnp.float32)
    h2 = jnp.maximum(h2 + b2_ref[...], 0.0)
    # layer3 (logits, lane-dense padded to 128 output columns)
    o_ref[...] = (
        jnp.dot(h2.astype(jnp.bfloat16), w3_ref[...], preferred_element_type=jnp.float32)
        + b3_ref[...]
    )


def sentiment_classifier_forward(x, params):
    """x: (B, input_size) float32. params: dict of w1,b1,w2,b2,w3,b3 (f32, (in,out))."""
    w1, b1 = params["w1"], params["b1"]
    w2, b2 = params["w2"], params["b2"]
    w3, b3 = params["w3"], params["b3"]

    B, in_size = x.shape
    h1_size = w1.shape[1]
    h2_size = w2.shape[1]
    out_size = w3.shape[1]

    # --- lane-dense padding -------------------------------------------------
    # Pad input feature axis to a multiple of 128 (zero pad x cols + w1 rows).
    k_pad = _round_up(in_size, 128)
    if k_pad != in_size:
        x = jnp.pad(x, ((0, 0), (0, k_pad - in_size)))
        w1 = jnp.pad(w1, ((0, k_pad - in_size), (0, 0)))
    # Pad output feature axis 3 -> 128 (zero-padded columns, sliced off below).
    out_pad = _round_up(out_size, 128)
    w3p = jnp.pad(w3, ((0, 0), (0, out_pad - out_size)))
    b3p = jnp.pad(b3, ((0, 0), (0, out_pad - out_size)))

    # --- batch tiling ------------------------------------------------------
    # Large batches: 256-row tiles (fills v6e/v7x 256-wide MXU M dim).
    # Small batches: one tile covering the (8-aligned) batch — no grid overhead.
    if B >= 256:
        tb = 256
    else:
        tb = max(8, _round_up(B, 8))
    b_pad = _round_up(B, tb)
    if b_pad != B:
        x = jnp.pad(x, ((0, b_pad - B), (0, 0)))

    # --- dtypes -------------------------------------------------------------
    w1b = w1.astype(jnp.bfloat16)
    w2b = w2.astype(jnp.bfloat16)
    w3b = w3p.astype(jnp.bfloat16)
    b1f = b1.astype(jnp.float32)
    b2f = b2.astype(jnp.float32)
    b3f = b3p.astype(jnp.float32)
    x = x.astype(jnp.float32)

    grid = (b_pad // tb,)

    out = pl.pallas_call(
        _mlp_kernel,
        out_shape=jax.ShapeDtypeStruct((b_pad, out_pad), jnp.float32),
        grid=grid,
        in_specs=[
            pl.BlockSpec((tb, k_pad), lambda i: (i, 0)),        # x: tiled over batch
            pl.BlockSpec((k_pad, h1_size), lambda i: (0, 0)),   # weights/biases resident
            pl.BlockSpec((1, h1_size), lambda i: (0, 0)),
            pl.BlockSpec((h1_size, h2_size), lambda i: (0, 0)),
            pl.BlockSpec((1, h2_size), lambda i: (0, 0)),
            pl.BlockSpec((h2_size, out_pad), lambda i: (0, 0)),
            pl.BlockSpec((1, out_pad), lambda i: (0, 0)),
        ],
        out_specs=pl.BlockSpec((tb, out_pad), lambda i: (i, 0)),
        compiler_params=pltpu.CompilerParams(
            dimension_semantics=("parallel",),  # v7x: shard batch tiles across both TCs
        ),
    )(x, w1b, b1f, w2b, b2f, w3b, b3f)

    return out[:B, :out_size]


def init_params(key, input_size, hidden1_size=256, hidden2_size=128, output_size=3):
    """Deterministic PyTorch-style (uniform +/- 1/sqrt(fan_in)) initialization."""
    keys = jax.random.split(key, 6)

    def linear(kw, kb, fan_in, fan_out):
        bound = 1.0 / math.sqrt(fan_in)
        w = jax.random.uniform(kw, (fan_in, fan_out), jnp.float32, -bound, bound)
        b = jax.random.uniform(kb, (1, fan_out), jnp.float32, -bound, bound)
        return w, b

    w1, b1 = linear(keys[0], keys[1], input_size, hidden1_size)
    w2, b2 = linear(keys[2], keys[3], hidden1_size, hidden2_size)
    w3, b3 = linear(keys[4], keys[5], hidden2_size, output_size)
    return {"w1": w1, "b1": b1, "w2": w2, "b2": b2, "w3": w3, "b3": b3}


def _ref_forward(x, params):
    """Pure-JAX reference in the same mixed precision (bf16 matmul inputs, f32 acc)."""
    bf = jnp.bfloat16
    h1 = jnp.dot(x.astype(bf), params["w1"].astype(bf), preferred_element_type=jnp.float32)
    h1 = jnp.maximum(h1 + params["b1"], 0.0)
    h2 = jnp.dot(h1.astype(bf), params["w2"].astype(bf), preferred_element_type=jnp.float32)
    h2 = jnp.maximum(h2 + params["b2"], 0.0)
    return jnp.dot(h2.astype(bf), params["w3"].astype(bf), preferred_element_type=jnp.float32) + params["b3"]


if __name__ == "__main__":
    # Small synthetic shapes consistent with the module:
    # seq_length=8, vocab_size=16 -> input_size = 8*16 = 128 (one-hot flattened).
    batch = 8
    seq_length, vocab_size = 8, 16
    input_size = seq_length * vocab_size
    hidden1_size, hidden2_size, output_size = 256, 128, 3

    key = jax.random.PRNGKey(0)
    k_params, k_x = jax.random.split(key)
    params = init_params(k_params, input_size, hidden1_size, hidden2_size, output_size)
    x = jax.random.uniform(k_x, (batch, input_size), jnp.float32)

    out = sentiment_classifier_forward(x, params)
    out = jax.block_until_ready(out)

    ref = _ref_forward(x, params)
    assert out.shape == (batch, output_size), out.shape
    assert jnp.allclose(out, ref, atol=2e-3, rtol=2e-3), float(jnp.max(jnp.abs(out - ref)))

    print("KERNEL_OK")
</pallas_src>

<mosaic_0001>
module attributes {stable_mosaic.version = 11 : i64} {
  func.func @_mlp_kernel(%arg0: i32, %arg1: memref<8x128xf32, #tpu.memory_space<vmem>>, %arg2: memref<128x256xbf16, #tpu.memory_space<vmem>>, %arg3: memref<1x256xf32, #tpu.memory_space<vmem>>, %arg4: memref<256x128xbf16, #tpu.memory_space<vmem>>, %arg5: memref<1x128xf32, #tpu.memory_space<vmem>>, %arg6: memref<128x128xbf16, #tpu.memory_space<vmem>>, %arg7: memref<1x128xf32, #tpu.memory_space<vmem>>, %arg8: memref<8x128xf32, #tpu.memory_space<vmem>>) attributes {dimension_semantics = [#tpu.dimension_semantics<parallel>], iteration_bounds = array<i64: 1>, scalar_prefetch = 0 : i64, scratch_operands = 0 : i64, tpu.core_type = #tpu.core_type<tc>, window_params = [{transform_indices = @transform_0, window_bounds = array<i64: 8, 128>}, {pipeline_mode = #tpu.pipeline_mode<synchronous>, transform_indices = @transform_1, window_bounds = array<i64: 128, 256>}, {pipeline_mode = #tpu.pipeline_mode<synchronous>, transform_indices = @transform_2, window_bounds = array<i64: 1, 256>}, {pipeline_mode = #tpu.pipeline_mode<synchronous>, transform_indices = @transform_3, window_bounds = array<i64: 256, 128>}, {pipeline_mode = #tpu.pipeline_mode<synchronous>, transform_indices = @transform_4, window_bounds = array<i64: 1, 128>}, {pipeline_mode = #tpu.pipeline_mode<synchronous>, transform_indices = @transform_5, window_bounds = array<i64: 128, 128>}, {pipeline_mode = #tpu.pipeline_mode<synchronous>, transform_indices = @transform_6, window_bounds = array<i64: 1, 128>}, {transform_indices = @transform_7, window_bounds = array<i64: 8, 128>}]} {
    %c0 = arith.constant 0 : index
    %c0_0 = arith.constant 0 : index
    %0 = vector.load %arg1[%c0, %c0_0] : memref<8x128xf32, #tpu.memory_space<vmem>>, vector<8x128xf32>
    %1 = arith.truncf %0 : vector<8x128xf32> to vector<8x128xbf16>
    %c0_1 = arith.constant 0 : index
    %c0_2 = arith.constant 0 : index
    %2 = vector.load %arg2[%c0_1, %c0_2] : memref<128x256xbf16, #tpu.memory_space<vmem>>, vector<128x256xbf16>
    %cst = arith.constant dense<0.000000e+00> : vector<8x256xf32>
    %3 = tpu.matmul %1, %2, %cst {dimension_numbers = #tpu.dot_dimension_numbers<[1], [0], [0], [1], [0, 0, 1, 1], [], []>} : vector<8x128xbf16>, vector<128x256xbf16>, vector<8x256xf32> -> vector<8x256xf32>
    %c0_3 = arith.constant 0 : index
    %c0_4 = arith.constant 0 : index
    %4 = vector.load %arg3[%c0_3, %c0_4] : memref<1x256xf32, #tpu.memory_space<vmem>>, vector<1x256xf32>
    %5 = vector.broadcast %4 : vector<1x256xf32> to vector<8x256xf32>
    %6 = arith.addf %3, %5 : vector<8x256xf32>
    %cst_5 = arith.constant 0.000000e+00 : f32
    %7 = vector.broadcast %cst_5 : f32 to vector<8x256xf32>
    %8 = arith.maximumf %6, %7 : vector<8x256xf32>
    %9 = arith.truncf %8 : vector<8x256xf32> to vector<8x256xbf16>
    %c0_6 = arith.constant 0 : index
    %c0_7 = arith.constant 0 : index
    %10 = vector.load %arg4[%c0_6, %c0_7] : memref<256x128xbf16, #tpu.memory_space<vmem>>, vector<256x128xbf16>
    %cst_8 = arith.constant dense<0.000000e+00> : vector<8x128xf32>
    %11 = tpu.matmul %9, %10, %cst_8 {dimension_numbers = #tpu.dot_dimension_numbers<[1], [0], [0], [1], [0, 0, 1, 1], [], []>} : vector<8x256xbf16>, vector<256x128xbf16>, vector<8x128xf32> -> vector<8x128xf32>
    %c0_9 = arith.constant 0 : index
    %c0_10 = arith.constant 0 : index
    %12 = vector.load %arg5[%c0_9, %c0_10] : memref<1x128xf32, #tpu.memory_space<vmem>>, vector<1x128xf32>
    %13 = vector.broadcast %12 : vector<1x128xf32> to vector<8x128xf32>
    %14 = arith.addf %11, %13 : vector<8x128xf32>
    %cst_11 = arith.constant 0.000000e+00 : f32
    %15 = vector.broadcast %cst_11 : f32 to vector<8x128xf32>
    %16 = arith.maximumf %14, %15 : vector<8x128xf32>
    %17 = arith.truncf %16 : vector<8x128xf32> to vector<8x128xbf16>
    %c0_12 = arith.constant 0 : index
    %c0_13 = arith.constant 0 : index
    %18 = vector.load %arg6[%c0_12, %c0_13] : memref<128x128xbf16, #tpu.memory_space<vmem>>, vector<128x128xbf16>
    %cst_14 = arith.constant dense<0.000000e+00> : vector<8x128xf32>
    %19 = tpu.matmul %17, %18, %cst_14 {dimension_numbers = #tpu.dot_dimension_numbers<[1], [0], [0], [1], [0, 0, 1, 1], [], []>} : vector<8x128xbf16>, vector<128x128xbf16>, vector<8x128xf32> -> vector<8x128xf32>
    %c0_15 = arith.constant 0 : index
    %c0_16 = arith.constant 0 : index
    %20 = vector.load %arg7[%c0_15, %c0_16] : memref<1x128xf32, #tpu.memory_space<vmem>>, vector<1x128xf32>
    %21 = vector.broadcast %20 : vector<1x128xf32> to vector<8x128xf32>
    %22 = arith.addf %19, %21 : vector<8x128xf32>
    %c0_17 = arith.constant 0 : index
    %c0_18 = arith.constant 0 : index
    %23 = vector.load %arg8[%c0_17, %c0_18] : memref<8x128xf32, #tpu.memory_space<vmem>>, vector<8x128xf32>
    tpu.vector_store %arg8[%c0_17, %c0_18], %22 {strides = array<i32>} : memref<8x128xf32, #tpu.memory_space<vmem>>, vector<8x128xf32>,
    return
  }
  func.func @transform_0(%arg0: i32) -> (i32, i32) {
    %c0_i32 = arith.constant 0 : i32
    %c0_i32_0 = arith.constant 0 : i32
    return %arg0, %c0_i32 : i32, i32
  }
  func.func @transform_1(%arg0: i32) -> (i32, i32) {
    %c0_i32 = arith.constant 0 : i32
    %c0_i32_0 = arith.constant 0 : i32
    %c0_i32_1 = arith.constant 0 : i32
    return %c0_i32, %c0_i32_0 : i32, i32
  }
  func.func @transform_2(%arg0: i32) -> (i32, i32) {
    %c0_i32 = arith.constant 0 : i32
    %c0_i32_0 = arith.constant 0 : i32
    %c0_i32_1 = arith.constant 0 : i32
    return %c0_i32, %c0_i32_0 : i32, i32
  }
  func.func @transform_3(%arg0: i32) -> (i32, i32) {
    %c0_i32 = arith.constant 0 : i32
    %c0_i32_0 = arith.constant 0 : i32
    %c0_i32_1 = arith.constant 0 : i32
    return %c0_i32, %c0_i32_0 : i32, i32
  }
  func.func @transform_4(%arg0: i32) -> (i32, i32) {
    %c0_i32 = arith.constant 0 : i32
    %c0_i32_0 = arith.constant 0 : i32
    %c0_i32_1 = arith.constant 0 : i32
    return %c0_i32, %c0_i32_0 : i32, i32
  }
  func.func @transform_5(%arg0: i32) -> (i32, i32) {
    %c0_i32 = arith.constant 0 : i32
    %c0_i32_0 = arith.constant 0 : i32
    %c0_i32_1 = arith.constant 0 : i32
    return %c0_i32, %c0_i32_0 : i32, i32
  }
  func.func @transform_6(%arg0: i32) -> (i32, i32) {
    %c0_i32 = arith.constant 0 : i32
    %c0_i32_0 = arith.constant 0 : i32
    %c0_i32_1 = arith.constant 0 : i32
    return %c0_i32, %c0_i32_0 : i32, i32
  }
  func.func @transform_7(%arg0: i32) -> (i32, i32) {
    %c0_i32 = arith.constant 0 : i32
    %c0_i32_0 = arith.constant 0 : i32
    return %arg0, %c0_i32 : i32, i32
  }
}

</mosaic_0001>

<llo_original>
// kernel: tpu_custom_call.1
$region0: #{tpu_custom_call.1}
  #allocation0 [shape = 'u32[]', space=smem, size = 0x4, offset = 0x4, fixed_abs, tag = 'smem constant byte address 0x4 - core index']
  #allocation1 [shape = 'u32[72,128]{1,0:T(1,128)}', space=vmem, size = 0x9000, scoped, tag = 'internal scratch']
  %s0 = inlined_call_operand.hbm [shape: f32[8,128], index: 0, kind: input, shape index: {}]
  %s1 = inlined_call_operand.hbm [shape: bf16[128,256], index: 1, kind: input, shape index: {}]
  %s2 = inlined_call_operand.hbm [shape: f32[1,256], index: 2, kind: input, shape index: {}]
  %s3 = inlined_call_operand.hbm [shape: bf16[256,128], index: 3, kind: input, shape index: {}]
  %s4 = inlined_call_operand.vmem [shape: f32[1,128], index: 4, kind: input, shape index: {}]
  %s5 = inlined_call_operand.hbm [shape: bf16[128,128], index: 5, kind: input, shape index: {}]
  %s6 = inlined_call_operand.vmem [shape: f32[1,128], index: 6, kind: input, shape index: {}]
  %s7 = inlined_call_operand.hbm [shape: f32[8,128], index: 7, kind: output, shape index: {}]
  %s8 = sld [smem:[#allocation0]]
  $region58: #{tpu_custom_call.1} parent=0
    _
  %s10 = ssub.s32 1, %s8
  %s11 = scalar_select 0, %s10, %s8
  $region1: #{tpu_custom_call.1} parent=0
    #allocation2 [shape = 'u8[4096]{0}', space=vmem, size = 0x1000, scoped, tag = 'input window, operand 0, single buffered']
    #allocation3 [shape = 's32[1]{0}', space=sflag, size = 0x4, scoped, tag = 'scoped memory for tpu_custom_call.1']
    #allocation4 [shape = 's32[1]{0}', space=sflag, size = 0x4, scoped, tag = 'scoped memory for tpu_custom_call.1']
    #allocation5 [shape = 'u8[65536]{0}', space=vmem, size = 0x10000, scoped, tag = 'input window, operand 1, single buffered']
    #allocation6 [shape = 's32[1]{0}', space=sflag, size = 0x4, scoped, tag = 'scoped memory for tpu_custom_call.1']
    #allocation7 [shape = 'u8[1024]{0}', space=vmem, size = 0x400, scoped, tag = 'input window, operand 2, single buffered']
    #allocation8 [shape = 'u8[65536]{0}', space=vmem, size = 0x10000, scoped, tag = 'input window, operand 3, single buffered']
    #allocation9 [shape = 's32[1]{0}', space=sflag, size = 0x4, scoped, tag = 'scoped memory for tpu_custom_call.1']
    #allocation10 [shape = 'u8[32768]{0}', space=vmem, size = 0x8000, scoped, tag = 'input window, operand 5, single buffered']
    #allocation11 [shape = 'u8[4096]{0}', space=vmem, size = 0x1000, scoped, tag = 'output window, operand 0, single buffered']
    %12 = vsyncpa [#allocation3], 0
    %13 = vsyncpa [#allocation6], 0
    %14 = vsyncpa [#allocation9], 0
    %15 = vsyncpa [#allocation4], 0
    // Predicated region
    $region2: #{tpu_custom_call.1} parent=1 // pred_check
      _
    $region3: #{tpu_custom_call.1} parent=1 // pred_check_branch
      %17 = sbr.rel (0) target = $region5
    $region4: #{tpu_custom_call.1} parent=1 // pred_region
      %19 = vsyncadd [#allocation3], 0
      %s21 = sshll.u32 %s0, 4
      %s22 = int_to_ptr.hbm [resolvable:$true] %s21
      %s23 = sshll.u32 [#allocation2], 4
      %s24 = int_to_ptr.vmem [resolvable:$true] %s23
      %26 = dma.hbm_to_vmem [thread:$0]  %s22, 128, %s24, [#allocation3]
    $region5: #{tpu_custom_call.1} parent=1 // pred_fallthru
      _
    // Predicated region
    $region6: #{tpu_custom_call.1} parent=1 // pred_check
      _
    $region7: #{tpu_custom_call.1} parent=1 // pred_check_branch
      %28 = sbr.rel (0) target = $region9
    $region8: #{tpu_custom_call.1} parent=1 // pred_region
      %30 = vsyncadd [#allocation6], 0
      %s31 = sshll.u32 %s1, 4
      %s32 = int_to_ptr.hbm [resolvable:$true] %s31
      %s33 = sshll.u32 [#allocation5], 4
      %s34 = int_to_ptr.vmem [resolvable:$true] %s33
      %39 = dma.hbm_to_vmem [thread:$0]  %s32, 2048, %s34, [#allocation6], 128, 128, 8
    $region9: #{tpu_custom_call.1} parent=1 // pred_fallthru
      _
    // Predicated region
    $region10: #{tpu_custom_call.1} parent=1 // pred_check
      _
    $region11: #{tpu_custom_call.1} parent=1 // pred_check_branch
      %41 = sbr.rel (0) target = $region13
    $region12: #{tpu_custom_call.1} parent=1 // pred_region
      %43 = vsyncadd [#allocation6], 0
      %s45 = sshll.u32 %s2, 4
      %s46 = int_to_ptr.hbm [resolvable:$true] %s45
      %s47 = sshll.u32 [#allocation7], 4
      %s48 = int_to_ptr.vmem [resolvable:$true] %s47
      %50 = dma.hbm_to_vmem [thread:$0]  %s46, 32, %s48, [#allocation6]
    $region13: #{tpu_custom_call.1} parent=1 // pred_fallthru
      _
    // Predicated region
    $region14: #{tpu_custom_call.1} parent=1 // pred_check
      _
    $region15: #{tpu_custom_call.1} parent=1 // pred_check_branch
      %52 = sbr.rel (0) target = $region17
    $region16: #{tpu_custom_call.1} parent=1 // pred_region
      %54 = vsyncadd [#allocation9], 0
      %s55 = sshll.u32 %s3, 4
      %s56 = int_to_ptr.hbm [resolvable:$true] %s55
      %s57 = sshll.u32 [#allocation8], 4
      %s58 = int_to_ptr.vmem [resolvable:$true] %s57
      %63 = dma.hbm_to_vmem [thread:$0]  %s56, 2048, %s58, [#allocation9], 64, 64, 4
    $region17: #{tpu_custom_call.1} parent=1 // pred_fallthru
      _
    // Predicated region
    $region18: #{tpu_custom_call.1} parent=1 // pred_check
      _
    $region19: #{tpu_custom_call.1} parent=1 // pred_check_branch
      %65 = sbr.rel (0) target = $region21
    $region20: #{tpu_custom_call.1} parent=1 // pred_region
      _
    $region21: #{tpu_custom_call.1} parent=1 // pred_fallthru
      _
    // Predicated region
    $region22: #{tpu_custom_call.1} parent=1 // pred_check
      _
    $region23: #{tpu_custom_call.1} parent=1 // pred_check_branch
      %67 = sbr.rel (0) target = $region25
    $region24: #{tpu_custom_call.1} parent=1 // pred_region
      %69 = vsyncadd [#allocation9], 0
      %s70 = sshll.u32 %s5, 4
      %s71 = int_to_ptr.hbm [resolvable:$true] %s70
      %s72 = sshll.u32 [#allocation10], 4
      %s73 = int_to_ptr.vmem [resolvable:$true] %s72
      %78 = dma.hbm_to_vmem [thread:$0]  %s71, 1024, %s73, [#allocation9], 64, 64, 4
    $region25: #{tpu_custom_call.1} parent=1 // pred_fallthru
      _
    // Predicated region
    $region26: #{tpu_custom_call.1} parent=1 // pred_check
      _
    $region27: #{tpu_custom_call.1} parent=1 // pred_check_branch
      %80 = sbr.rel (0) target = $region29
    $region28: #{tpu_custom_call.1} parent=1 // pred_region
      _
    $region29: #{tpu_custom_call.1} parent=1 // pred_fallthru
      _
    // Predicated region
    $region30: #{tpu_custom_call.1} parent=1 // pred_check
      _
    $region31: #{tpu_custom_call.1} parent=1 // pred_check_branch
      %82 = sbr.rel (0) target = $region33
    $region32: #{tpu_custom_call.1} parent=1 // pred_region
      %84 = dma.done [#allocation3], 128
    $region33: #{tpu_custom_call.1} parent=1 // pred_fallthru
      _
    // Predicated region
    $region34: #{tpu_custom_call.1} parent=1 // pred_check
      _
    $region35: #{tpu_custom_call.1} parent=1 // pred_check_branch
      %86 = sbr.rel (0) target = $region37
    $region36: #{tpu_custom_call.1} parent=1 // pred_region
      %88 = dma.done [#allocation6], 2048
    $region37: #{tpu_custom_call.1} parent=1 // pred_fallthru
      _
    // Predicated region
    $region38: #{tpu_custom_call.1} parent=1 // pred_check
      _
    $region39: #{tpu_custom_call.1} parent=1 // pred_check_branch
      %90 = sbr.rel (0) target = $region41
    $region40: #{tpu_custom_call.1} parent=1 // pred_region
      %92 = dma.done [#allocation6], 32
    $region41: #{tpu_custom_call.1} parent=1 // pred_fallthru
      _
    // Predicated region
    $region42: #{tpu_custom_call.1} parent=1 // pred_check
      _
    $region43: #{tpu_custom_call.1} parent=1 // pred_check_branch
      %94 = sbr.rel (0) target = $region45
    $region44: #{tpu_custom_call.1} parent=1 // pred_region
      %96 = dma.done [#allocation9], 2048
    $region45: #{tpu_custom_call.1} parent=1 // pred_fallthru
      _
    // Predicated region
    $region46: #{tpu_custom_call.1} parent=1 // pred_check
      _
    $region47: #{tpu_custom_call.1} parent=1 // pred_check_branch
      %98 = sbr.rel (0) target = $region49
    $region48: #{tpu_custom_call.1} parent=1 // pred_region
      %100 = dma.done [#allocation9], 1024
    $region49: #{tpu_custom_call.1} parent=1 // pred_fallthru
      _
    %v101 = vld [vmem:[#allocation2] sm:$0xff]
    %v102 = vpack.c.bf16 %v101, %v101
    %v103 = vld [vmem:[#allocation5] sm:$0xff]
    %v104 = vld [vmem:[#allocation5 + $0x8] sm:$0xff]
    %v105 = vld [vmem:[#allocation5 + $0x10] sm:$0xff]
    %v106 = vld [vmem:[#allocation5 + $0x18] sm:$0xff]
    %v107 = vld [vmem:[#allocation5 + $0x20] sm:$0xff]
    %v108 = vld [vmem:[#allocation5 + $0x28] sm:$0xff]
    %v109 = vld [vmem:[#allocation5 + $0x30] sm:$0xff]
    %v110 = vld [vmem:[#allocation5 + $0x38] sm:$0xff]
    %v111 = vld [vmem:[#allocation5 + $0x40] sm:$0xff]
    %v112 = vld [vmem:[#allocation5 + $0x48] sm:$0xff]
    %v113 = vld [vmem:[#allocation5 + $0x50] sm:$0xff]
    %v114 = vld [vmem:[#allocation5 + $0x58] sm:$0xff]
    %v115 = vld [vmem:[#allocation5 + $0x60] sm:$0xff]
    %v116 = vld [vmem:[#allocation5 + $0x68] sm:$0xff]
    %v117 = vld [vmem:[#allocation5 + $0x70] sm:$0xff]
    %v118 = vld [vmem:[#allocation5 + $0x78] sm:$0xff]
    %v119 = vld [vmem:[#allocation7] sm:$0x3]
    %v121 = vperm.slane %v119, 0
    %v122 = vperm.slane %v119, 1
    %v141 = vunpack.c.l.b16 %v103
    %v142 = vunpack.c.h.b16 %v103
    %v143 = vunpack.c.l.b16 %v104
    %v144 = vunpack.c.h.b16 %v104
    %v145 = vunpack.c.l.b16 %v105
    %v146 = vunpack.c.h.b16 %v105
    %v147 = vunpack.c.l.b16 %v106
    %v148 = vunpack.c.h.b16 %v106
    %v149 = vunpack.c.l.b16 %v107
    %v150 = vunpack.c.h.b16 %v107
    %v151 = vunpack.c.l.b16 %v108
    %v152 = vunpack.c.h.b16 %v108
    %v153 = vunpack.c.l.b16 %v109
    %v154 = vunpack.c.h.b16 %v109
    %v155 = vunpack.c.l.b16 %v110
    %v156 = vunpack.c.h.b16 %v110
    %v157 = vunpack.c.l.b16 %v111
    %v158 = vunpack.c.h.b16 %v111
    %v159 = vunpack.c.l.b16 %v112
    %v160 = vunpack.c.h.b16 %v112
    %v161 = vunpack.c.l.b16 %v113
    %v162 = vunpack.c.h.b16 %v113
    %v163 = vunpack.c.l.b16 %v114
    %v164 = vunpack.c.h.b16 %v114
    %v165 = vunpack.c.l.b16 %v115
    %v166 = vunpack.c.h.b16 %v115
    %v167 = vunpack.c.l.b16 %v116
    %v168 = vunpack.c.h.b16 %v116
    %v169 = vunpack.c.l.b16 %v117
    %v170 = vunpack.c.h.b16 %v117
    %v171 = vunpack.c.l.b16 %v118
    %v172 = vunpack.c.h.b16 %v118
    %v173 = vpack.c.b16 %v143, %v141
    %v174 = vpack.c.b16 %v144, %v142
    %v175 = vpack.c.b16 %v147, %v145
    %v176 = vpack.c.b16 %v148, %v146
    %v177 = vpack.c.b16 %v151, %v149
    %v178 = vpack.c.b16 %v152, %v150
    %v179 = vpack.c.b16 %v155, %v153
    %v180 = vpack.c.b16 %v156, %v154
    %v181 = vpack.c.b16 %v159, %v157
    %v182 = vpack.c.b16 %v160, %v158
    %v183 = vpack.c.b16 %v163, %v161
    %v184 = vpack.c.b16 %v164, %v162
    %v185 = vpack.c.b16 %v167, %v165
    %v186 = vpack.c.b16 %v168, %v166
    %v187 = vpack.c.b16 %v171, %v169
    %v188 = vpack.c.b16 %v172, %v170
    %205 = vmatpush.bf16.msra.mxu0 %v187
    %206 = vmatpush.bf16.msra.mxu0 %v185
    %207 = vmatpush.bf16.msra.mxu0 %v183
    %208 = vmatpush.bf16.msra.mxu0 %v181
    %209 = vmatpush.bf16.msra.mxu0 %v179
    %210 = vmatpush.bf16.msra.mxu0 %v177
    %211 = vmatpush.bf16.msra.mxu0 %v175
    %212 = vmatpush.bf16.msra.mxu0 %v173
    %213 = vmatmul.bf16.gmra.mxu0 %v102
    %v214 = vpop.f32.mrf.mxu0
    %v215 = vadd.f32 %v121, %v214
    %v216 = vpop.f32.mrf.mxu0
    %217 = vdwg.mxu0
    %218 = vmatpush.bf16.msra.mxu0 %v188
    %219 = vmatpush.bf16.msra.mxu0 %v186
    %220 = vmatpush.bf16.msra.mxu0 %v184
    %221 = vmatpush.bf16.msra.mxu0 %v182
    %222 = vmatpush.bf16.msra.mxu0 %v180
    %223 = vmatpush.bf16.msra.mxu0 %v178
    %224 = vmatpush.bf16.msra.mxu0 %v176
    %225 = vmatpush.bf16.msra.mxu0 %v174
    %226 = vmatmul.bf16.gmra.mxu0 %v102
    %v227 = vpop.f32.mrf.mxu0
    %v228 = vadd.f32 %v122, %v227
    %v229 = vpop.f32.mrf.mxu0
    %230 = vdwg.mxu0
    %v231 = vmax.f32 %v215, 0.0
    %v232 = vmax.f32 %v228, 0.0
    %v233 = vpack.c.bf16 %v231, %v231
    %v234 = vpack.c.bf16 %v232, %v232
    %v235 = vld [vmem:[#allocation8] sm:$0xf]
    %v236 = vld [vmem:[#allocation8 + $0x4] sm:$0xf]
    %v237 = vld [vmem:[#allocation8 + $0x8] sm:$0xf]
    %v238 = vld [vmem:[#allocation8 + $0xc] sm:$0xf]
    %v239 = vld [vmem:[#allocation8 + $0x10] sm:$0xf]
    %v240 = vld [vmem:[#allocation8 + $0x14] sm:$0xf]
    %v241 = vld [vmem:[#allocation8 + $0x18] sm:$0xf]
    %v242 = vld [vmem:[#allocation8 + $0x1c] sm:$0xf]
    %v243 = vld [vmem:[#allocation8 + $0x20] sm:$0xf]
    %v244 = vld [vmem:[#allocation8 + $0x24] sm:$0xf]
    %v245 = vld [vmem:[#allocation8 + $0x28] sm:$0xf]
    %v246 = vld [vmem:[#allocation8 + $0x2c] sm:$0xf]
    %v247 = vld [vmem:[#allocation8 + $0x30] sm:$0xf]
    %v248 = vld [vmem:[#allocation8 + $0x34] sm:$0xf]
    %v249 = vld [vmem:[#allocation8 + $0x38] sm:$0xf]
    %v250 = vld [vmem:[#allocation8 + $0x3c] sm:$0xf]
    %v251 = vld [vmem:[#allocation8 + $0x40] sm:$0xf]
    %v252 = vld [vmem:[#allocation8 + $0x44] sm:$0xf]
    %v253 = vld [vmem:[#allocation8 + $0x48] sm:$0xf]
    %v254 = vld [vmem:[#allocation8 + $0x4c] sm:$0xf]
    %v255 = vld [vmem:[#allocation8 + $0x50] sm:$0xf]
    %v256 = vld [vmem:[#allocation8 + $0x54] sm:$0xf]
    %v257 = vld [vmem:[#allocation8 + $0x58] sm:$0xf]
    %v258 = vld [vmem:[#allocation8 + $0x5c] sm:$0xf]
    %v259 = vld [vmem:[#allocation8 + $0x60] sm:$0xf]
    %v260 = vld [vmem:[#allocation8 + $0x64] sm:$0xf]
    %v261 = vld [vmem:[#allocation8 + $0x68] sm:$0xf]
    %v262 = vld [vmem:[#allocation8 + $0x6c] sm:$0xf]
    %v263 = vld [vmem:[#allocation8 + $0x70] sm:$0xf]
    %v264 = vld [vmem:[#allocation8 + $0x74] sm:$0xf]
    %v265 = vld [vmem:[#allocation8 + $0x78] sm:$0xf]
    %v266 = vld [vmem:[#allocation8 + $0x7c] sm:$0xf]
    %v267 = vld [vmem:[%s4] sm:$0x1]
    %v269 = vperm.slane %v267, 0
    %v303 = vunpack.c.l.b16 %v235
    %v304 = vunpack.c.l.b16 %v236
    %v305 = vunpack.c.l.b16 %v237
    %v306 = vunpack.c.l.b16 %v238
    %v307 = vunpack.c.l.b16 %v239
    %v308 = vunpack.c.l.b16 %v240
    %v309 = vunpack.c.l.b16 %v241
    %v310 = vunpack.c.l.b16 %v242
    %v311 = vunpack.c.l.b16 %v243
    %v312 = vunpack.c.l.b16 %v244
    %v313 = vunpack.c.l.b16 %v245
    %v314 = vunpack.c.l.b16 %v246
    %v315 = vunpack.c.l.b16 %v247
    %v316 = vunpack.c.l.b16 %v248
    %v317 = vunpack.c.l.b16 %v249
    %v318 = vunpack.c.l.b16 %v250
    %v319 = vunpack.c.l.b16 %v251
    %v320 = vunpack.c.l.b16 %v252
    %v321 = vunpack.c.l.b16 %v253
    %v322 = vunpack.c.l.b16 %v254
    %v323 = vunpack.c.l.b16 %v255
    %v324 = vunpack.c.l.b16 %v256
    %v325 = vunpack.c.l.b16 %v257
    %v326 = vunpack.c.l.b16 %v258
    %v327 = vunpack.c.l.b16 %v259
    %v328 = vunpack.c.l.b16 %v260
    %v329 = vunpack.c.l.b16 %v261
    %v330 = vunpack.c.l.b16 %v262
    %v331 = vunpack.c.l.b16 %v263
    %v332 = vunpack.c.l.b16 %v264
    %v333 = vunpack.c.l.b16 %v265
    %v334 = vunpack.c.l.b16 %v266
    %v335 = vpack.c.b16 %v304, %v303
    %v336 = vpack.c.b16 %v306, %v305
    %v337 = vpack.c.b16 %v308, %v307
    %v338 = vpack.c.b16 %v310, %v309
    %v339 = vpack.c.b16 %v312, %v311
    %v340 = vpack.c.b16 %v314, %v313
    %v341 = vpack.c.b16 %v316, %v315
    %v342 = vpack.c.b16 %v318, %v317
    %v343 = vpack.c.b16 %v320, %v319
    %v344 = vpack.c.b16 %v322, %v321
    %v345 = vpack.c.b16 %v324, %v323
    %v346 = vpack.c.b16 %v326, %v325
    %v347 = vpack.c.b16 %v328, %v327
    %v348 = vpack.c.b16 %v330, %v329
    %v349 = vpack.c.b16 %v332, %v331
    %v350 = vpack.c.b16 %v334, %v333
    %367 = vmatpush.bf16.msra.mxu0 %v342
    %368 = vmatpush.bf16.msra.mxu0 %v341
    %369 = vmatpush.bf16.msra.mxu0 %v340
    %370 = vmatpush.bf16.msra.mxu0 %v339
    %371 = vmatpush.bf16.msra.mxu0 %v338
    %372 = vmatpush.bf16.msra.mxu0 %v337
    %373 = vmatpush.bf16.msra.mxu0 %v336
    %374 = vmatpush.bf16.msra.mxu0 %v335
    %375 = vmatmul.bf16.gmra.mxu0 %v233
    %v376 = vpop.f32.mrf.mxu0
    %v377 = vadd.f32 %v269, %v376
    %v378 = vpop.f32.mrf.mxu0
    %379 = vdwg.mxu0
    %380 = vmatpush.bf16.msra.mxu0 %v350
    %381 = vmatpush.bf16.msra.mxu0 %v349
    %382 = vmatpush.bf16.msra.mxu0 %v348
    %383 = vmatpush.bf16.msra.mxu0 %v347
    %384 = vmatpush.bf16.msra.mxu0 %v346
    %385 = vmatpush.bf16.msra.mxu0 %v345
    %386 = vmatpush.bf16.msra.mxu0 %v344
    %387 = vmatpush.bf16.msra.mxu0 %v343
    %388 = vmatmul.bf16.gmra.mxu0 %v234
    %v389 = vpop.f32.mrf.mxu0
    %v390 = vadd.f32 %v377, %v389
    %v391 = vpop.f32.mrf.mxu0
    %392 = vdwg.mxu0
    %v393 = vmax.f32 %v390, 0.0
    %v394 = vpack.c.bf16 %v393, %v393
    %v395 = vld [vmem:[#allocation10] sm:$0xf]
    %v396 = vld [vmem:[#allocation10 + $0x4] sm:$0xf]
    %v397 = vld [vmem:[#allocation10 + $0x8] sm:$0xf]
    %v398 = vld [vmem:[#allocation10 + $0xc] sm:$0xf]
    %v399 = vld [vmem:[#allocation10 + $0x10] sm:$0xf]
    %v400 = vld [vmem:[#allocation10 + $0x14] sm:$0xf]
    %v401 = vld [vmem:[#allocation10 + $0x18] sm:$0xf]
    %v402 = vld [vmem:[#allocation10 + $0x1c] sm:$0xf]
    %v403 = vld [vmem:[#allocation10 + $0x20] sm:$0xf]
    %v404 = vld [vmem:[#allocation10 + $0x24] sm:$0xf]
    %v405 = vld [vmem:[#allocation10 + $0x28] sm:$0xf]
    %v406 = vld [vmem:[#allocation10 + $0x2c] sm:$0xf]
    %v407 = vld [vmem:[#allocation10 + $0x30] sm:$0xf]
    %v408 = vld [vmem:[#allocation10 + $0x34] sm:$0xf]
    %v409 = vld [vmem:[#allocation10 + $0x38] sm:$0xf]
    %v410 = vld [vmem:[#allocation10 + $0x3c] sm:$0xf]
    %v411 = vld [vmem:[%s6] sm:$0x1]
    %v413 = vperm.slane %v411, 0
    %v431 = vunpack.c.l.b16 %v395
    %v432 = vunpack.c.l.b16 %v396
    %v433 = vunpack.c.l.b16 %v397
    %v434 = vunpack.c.l.b16 %v398
    %v435 = vunpack.c.l.b16 %v399
    %v436 = vunpack.c.l.b16 %v400
    %v437 = vunpack.c.l.b16 %v401
    %v438 = vunpack.c.l.b16 %v402
    %v439 = vunpack.c.l.b16 %v403
    %v440 = vunpack.c.l.b16 %v404
    %v441 = vunpack.c.l.b16 %v405
    %v442 = vunpack.c.l.b16 %v406
    %v443 = vunpack.c.l.b16 %v407
    %v444 = vunpack.c.l.b16 %v408
    %v445 = vunpack.c.l.b16 %v409
    %v446 = vunpack.c.l.b16 %v410
    %v447 = vpack.c.b16 %v432, %v431
    %v448 = vpack.c.b16 %v434, %v433
    %v449 = vpack.c.b16 %v436, %v435
    %v450 = vpack.c.b16 %v438, %v437
    %v451 = vpack.c.b16 %v440, %v439
    %v452 = vpack.c.b16 %v442, %v441
    %v453 = vpack.c.b16 %v444, %v443
    %v454 = vpack.c.b16 %v446, %v445
    %463 = vmatpush.bf16.msra.mxu0 %v454
    %464 = vmatpush.bf16.msra.mxu0 %v453
    %465 = vmatpush.bf16.msra.mxu0 %v452
    %466 = vmatpush.bf16.msra.mxu0 %v451
    %467 = vmatpush.bf16.msra.mxu0 %v450
    %468 = vmatpush.bf16.msra.mxu0 %v449
    %469 = vmatpush.bf16.msra.mxu0 %v448
    %470 = vmatpush.bf16.msra.mxu0 %v447
    %471 = vmatmul.bf16.gmra.mxu0 %v394
    %v472 = vpop.f32.mrf.mxu0
    %v473 = vadd.f32 %v413, %v472
    %v474 = vpop.f32.mrf.mxu0
    %475 = vdwg.mxu0
    %476 = vst [vmem:[#allocation11] sm:$0xff] %v473
    // Predicated region
    $region50: #{tpu_custom_call.1} parent=1 // pred_check
      _
    $region51: #{tpu_custom_call.1} parent=1 // pred_check_branch
      %478 = sbr.rel (0) target = $region53
    $region52: #{tpu_custom_call.1} parent=1 // pred_region
      %480 = vsyncadd [#allocation4], 0
      %s482 = sshll.u32 [#allocation11], 4
      %s483 = int_to_ptr.vmem [resolvable:$true] %s482
      %s484 = sshll.u32 %s7, 4
      %s485 = int_to_ptr.hbm [resolvable:$true] %s484
      %487 = dma.vmem_to_hbm [thread:$0]  %s483, 128, %s485, [#allocation4]
    $region53: #{tpu_custom_call.1} parent=1 // pred_fallthru
      _
    // Predicated region
    $region54: #{tpu_custom_call.1} parent=1 // pred_check
      _
    $region55: #{tpu_custom_call.1} parent=1 // pred_check_branch
      %489 = sbr.rel (0) target = $region57
    $region56: #{tpu_custom_call.1} parent=1 // pred_region
      %491 = dma.done [#allocation4], 128
    $region57: #{tpu_custom_call.1} parent=1 // pred_fallthru
      _
    %492 = vsyncpa [#allocation3], 1
    %493 = vsyncpa [#allocation6], 1
    %494 = vsyncpa [#allocation9], 1
    %495 = vsyncpa [#allocation4], 1

</llo_original>
